<compile_context>
chip_gen: v5e
topology: v5e:2x2
jax: 0.10.0
libtpu: 0.0.40
codegen_flags: <defaults>
</compile_context>

<pallas_src>
import functools

import jax
import jax.numpy as jnp
from jax.experimental import pallas as pl
from jax.experimental.pallas import tpu as pltpu

EPS = 1e-5


def _basic_block_kernel(xpad_ref,      # (N*(H+2), W*Cin)   mxu dtype, row-padded, lane-folded input
                        w1_ref,        # (W*Cin, 4*W*Cout)  mxu dtype: [kh0 | kh1 | kh2 | 1x1 shortcut]
                        w2_ref,        # (W*Cout, 3*W*Cout) mxu dtype: [kh0 | kh1 | kh2]
                        b3_ref,        # (1, W*Cout) f32 shortcut bias (lane-broadcast)
                        g1_ref, be1_ref, g2_ref, be2_ref,   # (1, W*Cout) f32 BN affine
                        out_ref,       # (N*H, W*Cout) f32
                        acc_ref,       # scratch (N*H, W*Cout) f32
                        y1pad_ref,     # scratch (N*(H+2), W*Cout) f32, row-padded BN1/ReLU output
                        *, n_img, h_img, w_img, c_out):
    H = h_img
    Hp = H + 2
    WCo = w_img * c_out
    inv_n = 1.0 / float(n_img * h_img * w_img)
    mxu_dtype = xpad_ref.dtype

    def bn_fold(t, g, b):
        """Train-mode BN folded to per-channel scale/shift (lane-broadcast).

        Single pass column sums + sums-of-squares in exact f32; the W-group
        channel reduction uses a log2(W) roll doubling tree (XLU slot) when W
        is a power of two, otherwise a serial roll chain.
        """
        s = jnp.sum(t, axis=0, keepdims=True)
        q = jnp.sum(t * t, axis=0, keepdims=True)
        tot = jnp.concatenate([s, q], axis=0)               # (2, W*Cout)
        if w_img & (w_img - 1) == 0:
            sh = c_out
            while sh < WCo:                                  # log2(W) doubling tree
                tot = tot + pltpu.roll(tot, sh, axis=1)
                sh *= 2
        else:
            sq = tot
            for m in range(1, w_img):                        # fallback: serial chain
                tot = tot + pltpu.roll(sq, m * c_out, axis=1)
        mean = tot[0:1, :] * inv_n
        # NOTE: E[x^2]-mean^2 single pass; stats stay f32 (see review concern).
        var = tot[1:2, :] * inv_n - mean * mean              # biased variance
        scale = g * jax.lax.rsqrt(var + EPS)
        shift = b - mean * scale
        return scale, shift

    # ---- conv1 (3x3, pad=1) + fused 1x1 shortcut: ONE matmul over the whole
    #      padded slab (M = N*(H+2)); kh taps recombined with shifted-row adds.
    #      Conv biases dropped: train-mode BN cancels them exactly.
    t1 = jnp.dot(xpad_ref[...], w1_ref[...], preferred_element_type=jnp.float32)
    for n in range(n_img):
        ri = n * Hp            # padded-row base of image n
        ro = n * H             # output-row base of image n
        acc_ref[pl.ds(ro, H), :] = (t1[ri + 0:ri + 0 + H, 0 * WCo:1 * WCo]
                                    + t1[ri + 1:ri + 1 + H, 1 * WCo:2 * WCo]
                                    + t1[ri + 2:ri + 2 + H, 2 * WCo:3 * WCo])
        # shortcut parked in out_ref until the final residual add
        out_ref[pl.ds(ro, H), :] = t1[ri + 1:ri + 1 + H, 3 * WCo:4 * WCo] + b3_ref[...]

    # ---- BN1 + ReLU, fused directly into the row-padded staging-buffer store.
    acc1 = acc_ref[...]
    scale1, shift1 = bn_fold(acc1, g1_ref[...], be1_ref[...])
    zero_row = jnp.zeros((1, WCo), y1pad_ref.dtype)
    for n in range(n_img):
        ri = n * Hp
        ro = n * H
        y1pad_ref[pl.ds(ri, 1), :] = zero_row                # zero only the halo rows
        y1pad_ref[pl.ds(ri + H + 1, 1), :] = zero_row
        y1pad_ref[pl.ds(ri + 1, H), :] = jnp.maximum(
            acc1[ro:ro + H, :] * scale1 + shift1, 0.0).astype(y1pad_ref.dtype)

    # ---- conv2 (3x3, pad=1): ONE matmul (bf16 LHS via cast), shifted-row adds.
    # TODO(synk): at real shapes keep the staging buffer itself in bf16.
    t2 = jnp.dot(y1pad_ref[...].astype(mxu_dtype), w2_ref[...],
                 preferred_element_type=jnp.float32)
    for n in range(n_img):
        ri = n * Hp
        ro = n * H
        acc_ref[pl.ds(ro, H), :] = (t2[ri + 0:ri + 0 + H, 0 * WCo:1 * WCo]
                                    + t2[ri + 1:ri + 1 + H, 1 * WCo:2 * WCo]
                                    + t2[ri + 2:ri + 2 + H, 2 * WCo:3 * WCo])

    # ---- BN2 + residual add (shortcut parked in out_ref) + final ReLU.
    acc2 = acc_ref[...]
    scale2, shift2 = bn_fold(acc2, g2_ref[...], be2_ref[...])
    out_ref[...] = jnp.maximum(acc2 * scale2 + shift2 + out_ref[...], 0.0)


def _band_3x3(w, width):
    """(3,3,Ci,Co) HWIO kernel -> 3 block-banded (width*Ci, width*Co) tap matrices.

    Tap kh performs the whole (kw, Ci) contraction of one kernel row as a
    single matmul in the W-folded lane layout; out-of-range kw taps at the W
    boundary are absent (implements zero padding along W).
    TODO(synk): at real widths use dense (Ci, Co) taps with channels-on-lanes
    (lane fold = 128/Cout) instead of this O((W*C)^2) band.
    """
    return [sum(jnp.kron(jnp.eye(width, k=1 - kw, dtype=w.dtype), w[kh, kw])
                for kw in range(3))
            for kh in range(3)]


@functools.partial(jax.jit, static_argnames="mxu_dtype")
def basic_block_pallas(x_nchw, params, mxu_dtype=jnp.bfloat16):
    """BasicBlock forward.  x_nchw: (N, Cin, H, W) f32 -> (N, Cout, H, W) f32."""
    (w1, b1, g1, be1, w2, b2, g2, be2, w3, b3) = params
    del b1, b2  # cancelled exactly by train-mode BN mean subtraction
    N, Cin, H, W = x_nchw.shape
    Cout = w1.shape[-1]
    WCo = W * Cout
    Hp = H + 2

    # ---- layout glue: NCHW -> row-padded, lane-folded (rows, W*C) slab (bf16 for MXU).
    x = jnp.transpose(x_nchw, (0, 2, 3, 1))                        # NHWC
    xpad = jnp.pad(x, ((0, 0), (1, 1), (0, 0), (0, 0)))            # pad H only
    xpad2d = xpad.reshape(N * Hp, W * Cin).astype(mxu_dtype)

    # ---- weight preprocessing (done once in real use): all taps of conv1 plus
    #      the 1x1 shortcut stacked along the output/N axis (one wide matmul);
    #      likewise all 3 taps of conv2.
    band1 = _band_3x3(w1, W)                                       # 3 x (W*Cin, W*Cout)
    scband = jnp.kron(jnp.eye(W, dtype=w3.dtype), w3)              # 1x1 shortcut band
    w1f = jnp.concatenate(band1 + [scband], axis=1).astype(mxu_dtype)   # (W*Cin, 4*W*Cout)
    w2f = jnp.concatenate(_band_3x3(w2, W), axis=1).astype(mxu_dtype)   # (W*Cout, 3*W*Cout)

    def lane(v):  # per-channel (1, Cout) vector -> lane-broadcast (1, W*Cout) f32
        return jnp.tile(v.reshape(-1), W).reshape(1, WCo).astype(jnp.float32)

    vmem = pl.BlockSpec(memory_space=pltpu.MemorySpace.VMEM)
    kernel = functools.partial(_basic_block_kernel,
                               n_img=N, h_img=H, w_img=W, c_out=Cout)
    out2d = pl.pallas_call(
        kernel,
        out_shape=jax.ShapeDtypeStruct((N * H, WCo), jnp.float32),
        in_specs=[vmem] * 8,
        out_specs=vmem,
        scratch_shapes=[
            pltpu.VMEM((N * H, WCo), jnp.float32),           # conv accumulator (f32)
            pltpu.VMEM((N * Hp, WCo), jnp.float32),          # row-padded BN1/ReLU output
        ],
        compiler_params=pltpu.CompilerParams(vmem_limit_bytes=16 * 1024 * 1024),
    )(xpad2d, w1f, w2f, lane(b3), lane(g1), lane(be1), lane(g2), lane(be2))

    return jnp.transpose(out2d.reshape(N, H, W, Cout), (0, 3, 1, 2))   # -> NCHW


def init_params(key, cin, cout):
    """Deterministic synthetic parameters (shapes match the PyTorch __init__)."""
    ks = jax.random.split(key, 8)

    def uconv(k, shape, fan_in):
        bound = 1.0 / jnp.sqrt(fan_in)
        return jax.random.uniform(k, shape, jnp.float32, -bound, bound)

    # conv weights stored HWIO (kernel layout); PyTorch would be OIHW.
    w1 = uconv(ks[0], (3, 3, cin, cout), cin * 9)
    b1 = uconv(ks[1], (1, cout), cin * 9)
    w2 = uconv(ks[2], (3, 3, cout, cout), cout * 9)
    b2 = uconv(ks[3], (1, cout), cout * 9)
    w3 = uconv(ks[4], (1, 1, cin, cout), cin).reshape(cin, cout)
    b3 = uconv(ks[5], (1, cout), cin)
    # BN affine params (nontrivial but deterministic)
    g1 = 0.5 + jax.random.uniform(ks[6], (1, cout), jnp.float32)
    be1 = 0.1 * jax.random.normal(ks[7], (1, cout), jnp.float32)
    g2 = jnp.ones((1, cout), jnp.float32)
    be2 = jnp.zeros((1, cout), jnp.float32)
    return (w1, b1, g1, be1, w2, b2, g2, be2, w3, b3)


def basic_block_reference(x_nchw, params):
    """Pure-JAX f32 reference (XLA convs, conv biases included)."""
    (w1, b1, g1, be1, w2, b2, g2, be2, w3, b3) = params
    x = jnp.transpose(x_nchw, (0, 2, 3, 1))
    dn = ("NHWC", "HWIO", "NHWC")

    def conv(x, w, b, pad):
        y = jax.lax.conv_general_dilated(x, w, (1, 1), [(pad, pad), (pad, pad)],
                                         dimension_numbers=dn)
        return y + b.reshape(1, 1, 1, -1)

    def bn(x, g, be):
        m = jnp.mean(x, axis=(0, 1, 2), keepdims=True)
        v = jnp.mean((x - m) ** 2, axis=(0, 1, 2), keepdims=True)
        return (x - m) * jax.lax.rsqrt(v + EPS) * g.reshape(1, 1, 1, -1) + be.reshape(1, 1, 1, -1)

    y = jax.nn.relu(bn(conv(x, w1, b1, 1), g1, be1))
    y = bn(conv(y, w2, b2, 1), g2, be2)
    sc = conv(x, w3.reshape(1, 1, *w3.shape), b3, 0)
    out = jax.nn.relu(y + sc)
    return jnp.transpose(out, (0, 3, 1, 2))


if __name__ == "__main__":
    key = jax.random.PRNGKey(0)
    k_x, k_p = jax.random.split(key)

    N, Cin, Cout, H, W = 2, 4, 8, 16, 16
    x = jax.random.normal(k_x, (N, Cin, H, W), jnp.float32)   # PyTorch NCHW input
    params = init_params(k_p, Cin, Cout)

    ref = basic_block_reference(x, params)

    # Structural correctness: f32 MXU inputs must match the f32 XLA reference tightly.
    out_f32 = jax.block_until_ready(basic_block_pallas(x, params, mxu_dtype=jnp.float32))
    assert out_f32.shape == (N, Cout, H, W)
    err_f32 = float(jnp.max(jnp.abs(out_f32 - ref)))
    assert err_f32 < 1e-3, f"f32 path: max abs error too large: {err_f32}"

    # Fast path: bf16 MXU inputs (native on v5e/v6e/v7x).  Tolerance reflects bf16
    # input rounding only -- the structure is validated exactly by the f32 run above.
    out_bf16 = jax.block_until_ready(basic_block_pallas(x, params, mxu_dtype=jnp.bfloat16))
    assert out_bf16.shape == (N, Cout, H, W)
    err_bf16 = float(jnp.max(jnp.abs(out_bf16 - ref)))
    assert err_bf16 < 8e-2, f"bf16 path: max abs error too large: {err_bf16}"

    print("KERNEL_OK")
</pallas_src>

<mosaic_0001>
module attributes {stable_mosaic.version = 11 : i64} {
  func.func @_basic_block_kernel(%arg0: memref<36x64xf32, #tpu.memory_space<vmem>>, %arg1: memref<64x512xf32, #tpu.memory_space<vmem>>, %arg2: memref<128x384xf32, #tpu.memory_space<vmem>>, %arg3: memref<1x128xf32, #tpu.memory_space<vmem>>, %arg4: memref<1x128xf32, #tpu.memory_space<vmem>>, %arg5: memref<1x128xf32, #tpu.memory_space<vmem>>, %arg6: memref<1x128xf32, #tpu.memory_space<vmem>>, %arg7: memref<1x128xf32, #tpu.memory_space<vmem>>, %arg8: memref<32x128xf32, #tpu.memory_space<vmem>>, %arg9: memref<32x128xf32, #tpu.memory_space<vmem>>, %arg10: memref<36x128xf32, #tpu.memory_space<vmem>>) attributes {dimension_semantics = [], scalar_prefetch = 0 : i64, scratch_operands = 2 : i64, tpu.core_type = #tpu.core_type<tc>} {
    %c0 = arith.constant 0 : index
    %c0_0 = arith.constant 0 : index
    %0 = vector.load %arg0[%c0, %c0_0] : memref<36x64xf32, #tpu.memory_space<vmem>>, vector<36x64xf32>
    %c0_1 = arith.constant 0 : index
    %c0_2 = arith.constant 0 : index
    %1 = vector.load %arg1[%c0_1, %c0_2] : memref<64x512xf32, #tpu.memory_space<vmem>>, vector<64x512xf32>
    %cst = arith.constant dense<0.000000e+00> : vector<36x512xf32>
    %2 = tpu.matmul %0, %1, %cst {dimension_numbers = #tpu.dot_dimension_numbers<[1], [0], [0], [1], [0, 0, 1, 1], [], []>} : vector<36x64xf32>, vector<64x512xf32>, vector<36x512xf32> -> vector<36x512xf32>
    %3 = vector.extract_strided_slice %2 {offsets = [0, 0], sizes = [16, 128], strides = [1, 1]} : vector<36x512xf32> to vector<16x128xf32>
    %4 = vector.extract_strided_slice %2 {offsets = [1, 128], sizes = [16, 128], strides = [1, 1]} : vector<36x512xf32> to vector<16x128xf32>
    %5 = arith.addf %3, %4 : vector<16x128xf32>
    %6 = vector.extract_strided_slice %2 {offsets = [2, 256], sizes = [16, 128], strides = [1, 1]} : vector<36x512xf32> to vector<16x128xf32>
    %7 = arith.addf %5, %6 : vector<16x128xf32>
    %c0_3 = arith.constant 0 : index
    %c0_4 = arith.constant 0 : index
    %8 = vector.load %arg9[%c0_3, %c0_4] : memref<32x128xf32, #tpu.memory_space<vmem>>, vector<16x128xf32>
    tpu.vector_store %arg9[%c0_3, %c0_4], %7 {strides = array<i32>} : memref<32x128xf32, #tpu.memory_space<vmem>>, vector<16x128xf32>,
    %9 = vector.extract_strided_slice %2 {offsets = [1, 384], sizes = [16, 128], strides = [1, 1]} : vector<36x512xf32> to vector<16x128xf32>
    %c0_5 = arith.constant 0 : index
    %c0_6 = arith.constant 0 : index
    %10 = vector.load %arg3[%c0_5, %c0_6] : memref<1x128xf32, #tpu.memory_space<vmem>>, vector<1x128xf32>
    %11 = vector.broadcast %10 : vector<1x128xf32> to vector<16x128xf32>
    %12 = arith.addf %9, %11 : vector<16x128xf32>
    %c0_7 = arith.constant 0 : index
    %c0_8 = arith.constant 0 : index
    %13 = vector.load %arg8[%c0_7, %c0_8] : memref<32x128xf32, #tpu.memory_space<vmem>>, vector<16x128xf32>
    tpu.vector_store %arg8[%c0_7, %c0_8], %12 {strides = array<i32>} : memref<32x128xf32, #tpu.memory_space<vmem>>, vector<16x128xf32>,
    %14 = vector.extract_strided_slice %2 {offsets = [18, 0], sizes = [16, 128], strides = [1, 1]} : vector<36x512xf32> to vector<16x128xf32>
    %15 = vector.extract_strided_slice %2 {offsets = [19, 128], sizes = [16, 128], strides = [1, 1]} : vector<36x512xf32> to vector<16x128xf32>
    %16 = arith.addf %14, %15 : vector<16x128xf32>
    %17 = vector.extract_strided_slice %2 {offsets = [20, 256], sizes = [16, 128], strides = [1, 1]} : vector<36x512xf32> to vector<16x128xf32>
    %18 = arith.addf %16, %17 : vector<16x128xf32>
    %c16 = arith.constant 16 : index
    %c0_9 = arith.constant 0 : index
    %19 = vector.load %arg9[%c16, %c0_9] : memref<32x128xf32, #tpu.memory_space<vmem>>, vector<16x128xf32>
    tpu.vector_store %arg9[%c16, %c0_9], %18 {strides = array<i32>} : memref<32x128xf32, #tpu.memory_space<vmem>>, vector<16x128xf32>,
    %20 = vector.extract_strided_slice %2 {offsets = [19, 384], sizes = [16, 128], strides = [1, 1]} : vector<36x512xf32> to vector<16x128xf32>
    %c0_10 = arith.constant 0 : index
    %c0_11 = arith.constant 0 : index
    %21 = vector.load %arg3[%c0_10, %c0_11] : memref<1x128xf32, #tpu.memory_space<vmem>>, vector<1x128xf32>
    %22 = vector.broadcast %21 : vector<1x128xf32> to vector<16x128xf32>
    %23 = arith.addf %20, %22 : vector<16x128xf32>
    %c16_12 = arith.constant 16 : index
    %c0_13 = arith.constant 0 : index
    %24 = vector.load %arg8[%c16_12, %c0_13] : memref<32x128xf32, #tpu.memory_space<vmem>>, vector<16x128xf32>
    tpu.vector_store %arg8[%c16_12, %c0_13], %23 {strides = array<i32>} : memref<32x128xf32, #tpu.memory_space<vmem>>, vector<16x128xf32>,
    %c0_14 = arith.constant 0 : index
    %c0_15 = arith.constant 0 : index
    %25 = vector.load %arg9[%c0_14, %c0_15] : memref<32x128xf32, #tpu.memory_space<vmem>>, vector<32x128xf32>
    %c0_16 = arith.constant 0 : index
    %c0_17 = arith.constant 0 : index
    %26 = vector.load %arg4[%c0_16, %c0_17] : memref<1x128xf32, #tpu.memory_space<vmem>>, vector<1x128xf32>
    %c0_18 = arith.constant 0 : index
    %c0_19 = arith.constant 0 : index
    %27 = vector.load %arg5[%c0_18, %c0_19] : memref<1x128xf32, #tpu.memory_space<vmem>>, vector<1x128xf32>
    %cst_20 = arith.constant dense<0.000000e+00> : vector<128xf32>
    %28 = vector.multi_reduction <add>, %25, %cst_20 [0] : vector<32x128xf32> to vector<128xf32>
    %29 = vector.shape_cast %28 : vector<128xf32> to vector<1x128xf32>
    %30 = arith.mulf %25, %25 : vector<32x128xf32>
    %cst_21 = arith.constant dense<0.000000e+00> : vector<128xf32>
    %31 = vector.multi_reduction <add>, %30, %cst_21 [0] : vector<32x128xf32> to vector<128xf32>
    %32 = vector.shape_cast %31 : vector<128xf32> to vector<1x128xf32>
    %33 = tpu.concatenate %29, %32 in 0 : vector<1x128xf32>, vector<1x128xf32> -> vector<2x128xf32>
    %c8_i32 = arith.constant 8 : i32
    %34 = tpu.dynamic_rotate %33 by %c8_i32 dim 1 : vector<2x128xf32>, i32 -> vector<2x128xf32>
    %35 = arith.addf %33, %34 : vector<2x128xf32>
    %c16_i32 = arith.constant 16 : i32
    %36 = tpu.dynamic_rotate %35 by %c16_i32 dim 1 : vector<2x128xf32>, i32 -> vector<2x128xf32>
    %37 = arith.addf %35, %36 : vector<2x128xf32>
    %c32_i32 = arith.constant 32 : i32
    %38 = tpu.dynamic_rotate %37 by %c32_i32 dim 1 : vector<2x128xf32>, i32 -> vector<2x128xf32>
    %39 = arith.addf %37, %38 : vector<2x128xf32>
    %c64_i32 = arith.constant 64 : i32
    %40 = tpu.dynamic_rotate %39 by %c64_i32 dim 1 : vector<2x128xf32>, i32 -> vector<2x128xf32>
    %41 = arith.addf %39, %40 : vector<2x128xf32>
    %42 = vector.extract_strided_slice %41 {offsets = [0, 0], sizes = [1, 128], strides = [1, 1]} : vector<2x128xf32> to vector<1x128xf32>
    %cst_22 = arith.constant 0.001953125 : f32
    %43 = vector.broadcast %cst_22 : f32 to vector<1x128xf32>
    %44 = arith.mulf %42, %43 : vector<1x128xf32>
    %45 = vector.extract_strided_slice %41 {offsets = [1, 0], sizes = [1, 128], strides = [1, 1]} : vector<2x128xf32> to vector<1x128xf32>
    %cst_23 = arith.constant 0.001953125 : f32
    %46 = vector.broadcast %cst_23 : f32 to vector<1x128xf32>
    %47 = arith.mulf %45, %46 : vector<1x128xf32>
    %48 = arith.mulf %44, %44 : vector<1x128xf32>
    %49 = arith.subf %47, %48 : vector<1x128xf32>
    %cst_24 = arith.constant 9.99999974E-6 : f32
    %50 = vector.broadcast %cst_24 : f32 to vector<1x128xf32>
    %51 = arith.addf %49, %50 : vector<1x128xf32>
    %52 = math.rsqrt %51 : vector<1x128xf32>
    %53 = arith.mulf %26, %52 : vector<1x128xf32>
    %54 = arith.mulf %44, %53 : vector<1x128xf32>
    %55 = arith.subf %27, %54 : vector<1x128xf32>
    %cst_25 = arith.constant 0.000000e+00 : f32
    %56 = vector.broadcast %cst_25 : f32 to vector<1x128xf32>
    %c0_26 = arith.constant 0 : index
    %c0_27 = arith.constant 0 : index
    %57 = vector.load %arg10[%c0_26, %c0_27] : memref<36x128xf32, #tpu.memory_space<vmem>>, vector<1x128xf32>
    tpu.vector_store %arg10[%c0_26, %c0_27], %56 {strides = array<i32>} : memref<36x128xf32, #tpu.memory_space<vmem>>, vector<1x128xf32>,
    %c17 = arith.constant 17 : index
    %c0_28 = arith.constant 0 : index
    %58 = vector.load %arg10[%c17, %c0_28] : memref<36x128xf32, #tpu.memory_space<vmem>>, vector<1x128xf32>
    tpu.vector_store %arg10[%c17, %c0_28], %56 {strides = array<i32>} : memref<36x128xf32, #tpu.memory_space<vmem>>, vector<1x128xf32>,
    %59 = vector.extract_strided_slice %25 {offsets = [0, 0], sizes = [16, 128], strides = [1, 1]} : vector<32x128xf32> to vector<16x128xf32>
    %60 = vector.broadcast %53 : vector<1x128xf32> to vector<16x128xf32>
    %61 = arith.mulf %59, %60 : vector<16x128xf32>
    %62 = vector.broadcast %55 : vector<1x128xf32> to vector<16x128xf32>
    %63 = arith.addf %61, %62 : vector<16x128xf32>
    %cst_29 = arith.constant 0.000000e+00 : f32
    %64 = vector.broadcast %cst_29 : f32 to vector<16x128xf32>
    %65 = arith.maximumf %63, %64 : vector<16x128xf32>
    %c1 = arith.constant 1 : index
    %c0_30 = arith.constant 0 : index
    %66 = vector.load %arg10[%c1, %c0_30] : memref<36x128xf32, #tpu.memory_space<vmem>>, vector<16x128xf32>
    tpu.vector_store %arg10[%c1, %c0_30], %65 {strides = array<i32>} : memref<36x128xf32, #tpu.memory_space<vmem>>, vector<16x128xf32>,
    %c18 = arith.constant 18 : index
    %c0_31 = arith.constant 0 : index
    %67 = vector.load %arg10[%c18, %c0_31] : memref<36x128xf32, #tpu.memory_space<vmem>>, vector<1x128xf32>
    tpu.vector_store %arg10[%c18, %c0_31], %56 {strides = array<i32>} : memref<36x128xf32, #tpu.memory_space<vmem>>, vector<1x128xf32>,
    %c35 = arith.constant 35 : index
    %c0_32 = arith.constant 0 : index
    %68 = vector.load %arg10[%c35, %c0_32] : memref<36x128xf32, #tpu.memory_space<vmem>>, vector<1x128xf32>
    tpu.vector_store %arg10[%c35, %c0_32], %56 {strides = array<i32>} : memref<36x128xf32, #tpu.memory_space<vmem>>, vector<1x128xf32>,
    %69 = vector.extract_strided_slice %25 {offsets = [16, 0], sizes = [16, 128], strides = [1, 1]} : vector<32x128xf32> to vector<16x128xf32>
    %70 = vector.broadcast %53 : vector<1x128xf32> to vector<16x128xf32>
    %71 = arith.mulf %69, %70 : vector<16x128xf32>
    %72 = vector.broadcast %55 : vector<1x128xf32> to vector<16x128xf32>
    %73 = arith.addf %71, %72 : vector<16x128xf32>
    %cst_33 = arith.constant 0.000000e+00 : f32
    %74 = vector.broadcast %cst_33 : f32 to vector<16x128xf32>
    %75 = arith.maximumf %73, %74 : vector<16x128xf32>
    %c19 = arith.constant 19 : index
    %c0_34 = arith.constant 0 : index
    %76 = vector.load %arg10[%c19, %c0_34] : memref<36x128xf32, #tpu.memory_space<vmem>>, vector<16x128xf32>
    tpu.vector_store %arg10[%c19, %c0_34], %75 {strides = array<i32>} : memref<36x128xf32, #tpu.memory_space<vmem>>, vector<16x128xf32>,
    %c0_35 = arith.constant 0 : index
    %c0_36 = arith.constant 0 : index
    %77 = vector.load %arg10[%c0_35, %c0_36] : memref<36x128xf32, #tpu.memory_space<vmem>>, vector<36x128xf32>
    %c0_37 = arith.constant 0 : index
    %c0_38 = arith.constant 0 : index
    %78 = vector.load %arg2[%c0_37, %c0_38] : memref<128x384xf32, #tpu.memory_space<vmem>>, vector<128x384xf32>
    %cst_39 = arith.constant dense<0.000000e+00> : vector<36x384xf32>
    %79 = tpu.matmul %77, %78, %cst_39 {dimension_numbers = #tpu.dot_dimension_numbers<[1], [0], [0], [1], [0, 0, 1, 1], [], []>} : vector<36x128xf32>, vector<128x384xf32>, vector<36x384xf32> -> vector<36x384xf32>
    %80 = vector.extract_strided_slice %79 {offsets = [0, 0], sizes = [16, 128], strides = [1, 1]} : vector<36x384xf32> to vector<16x128xf32>
    %81 = vector.extract_strided_slice %79 {offsets = [1, 128], sizes = [16, 128], strides = [1, 1]} : vector<36x384xf32> to vector<16x128xf32>
    %82 = arith.addf %80, %81 : vector<16x128xf32>
    %83 = vector.extract_strided_slice %79 {offsets = [2, 256], sizes = [16, 128], strides = [1, 1]} : vector<36x384xf32> to vector<16x128xf32>
    %84 = arith.addf %82, %83 : vector<16x128xf32>
    %c0_40 = arith.constant 0 : index
    %c0_41 = arith.constant 0 : index
    %85 = vector.load %arg9[%c0_40, %c0_41] : memref<32x128xf32, #tpu.memory_space<vmem>>, vector<16x128xf32>
    tpu.vector_store %arg9[%c0_40, %c0_41], %84 {strides = array<i32>} : memref<32x128xf32, #tpu.memory_space<vmem>>, vector<16x128xf32>,
    %86 = vector.extract_strided_slice %79 {offsets = [18, 0], sizes = [16, 128], strides = [1, 1]} : vector<36x384xf32> to vector<16x128xf32>
    %87 = vector.extract_strided_slice %79 {offsets = [19, 128], sizes = [16, 128], strides = [1, 1]} : vector<36x384xf32> to vector<16x128xf32>
    %88 = arith.addf %86, %87 : vector<16x128xf32>
    %89 = vector.extract_strided_slice %79 {offsets = [20, 256], sizes = [16, 128], strides = [1, 1]} : vector<36x384xf32> to vector<16x128xf32>
    %90 = arith.addf %88, %89 : vector<16x128xf32>
    %c16_42 = arith.constant 16 : index
    %c0_43 = arith.constant 0 : index
    %91 = vector.load %arg9[%c16_42, %c0_43] : memref<32x128xf32, #tpu.memory_space<vmem>>, vector<16x128xf32>
    tpu.vector_store %arg9[%c16_42, %c0_43], %90 {strides = array<i32>} : memref<32x128xf32, #tpu.memory_space<vmem>>, vector<16x128xf32>,
    %c0_44 = arith.constant 0 : index
    %c0_45 = arith.constant 0 : index
    %92 = vector.load %arg9[%c0_44, %c0_45] : memref<32x128xf32, #tpu.memory_space<vmem>>, vector<32x128xf32>
    %c0_46 = arith.constant 0 : index
    %c0_47 = arith.constant 0 : index
    %93 = vector.load %arg6[%c0_46, %c0_47] : memref<1x128xf32, #tpu.memory_space<vmem>>, vector<1x128xf32>
    %c0_48 = arith.constant 0 : index
    %c0_49 = arith.constant 0 : index
    %94 = vector.load %arg7[%c0_48, %c0_49] : memref<1x128xf32, #tpu.memory_space<vmem>>, vector<1x128xf32>
    %cst_50 = arith.constant dense<0.000000e+00> : vector<128xf32>
    %95 = vector.multi_reduction <add>, %92, %cst_50 [0] : vector<32x128xf32> to vector<128xf32>
    %96 = vector.shape_cast %95 : vector<128xf32> to vector<1x128xf32>
    %97 = arith.mulf %92, %92 : vector<32x128xf32>
    %cst_51 = arith.constant dense<0.000000e+00> : vector<128xf32>
    %98 = vector.multi_reduction <add>, %97, %cst_51 [0] : vector<32x128xf32> to vector<128xf32>
    %99 = vector.shape_cast %98 : vector<128xf32> to vector<1x128xf32>
    %100 = tpu.concatenate %96, %99 in 0 : vector<1x128xf32>, vector<1x128xf32> -> vector<2x128xf32>
    %c8_i32_52 = arith.constant 8 : i32
    %101 = tpu.dynamic_rotate %100 by %c8_i32_52 dim 1 : vector<2x128xf32>, i32 -> vector<2x128xf32>
    %102 = arith.addf %100, %101 : vector<2x128xf32>
    %c16_i32_53 = arith.constant 16 : i32
    %103 = tpu.dynamic_rotate %102 by %c16_i32_53 dim 1 : vector<2x128xf32>, i32 -> vector<2x128xf32>
    %104 = arith.addf %102, %103 : vector<2x128xf32>
    %c32_i32_54 = arith.constant 32 : i32
    %105 = tpu.dynamic_rotate %104 by %c32_i32_54 dim 1 : vector<2x128xf32>, i32 -> vector<2x128xf32>
    %106 = arith.addf %104, %105 : vector<2x128xf32>
    %c64_i32_55 = arith.constant 64 : i32
    %107 = tpu.dynamic_rotate %106 by %c64_i32_55 dim 1 : vector<2x128xf32>, i32 -> vector<2x128xf32>
    %108 = arith.addf %106, %107 : vector<2x128xf32>
    %109 = vector.extract_strided_slice %108 {offsets = [0, 0], sizes = [1, 128], strides = [1, 1]} : vector<2x128xf32> to vector<1x128xf32>
    %cst_56 = arith.constant 0.001953125 : f32
    %110 = vector.broadcast %cst_56 : f32 to vector<1x128xf32>
    %111 = arith.mulf %109, %110 : vector<1x128xf32>
    %112 = vector.extract_strided_slice %108 {offsets = [1, 0], sizes = [1, 128], strides = [1, 1]} : vector<2x128xf32> to vector<1x128xf32>
    %cst_57 = arith.constant 0.001953125 : f32
    %113 = vector.broadcast %cst_57 : f32 to vector<1x128xf32>
    %114 = arith.mulf %112, %113 : vector<1x128xf32>
    %115 = arith.mulf %111, %111 : vector<1x128xf32>
    %116 = arith.subf %114, %115 : vector<1x128xf32>
    %cst_58 = arith.constant 9.99999974E-6 : f32
    %117 = vector.broadcast %cst_58 : f32 to vector<1x128xf32>
    %118 = arith.addf %116, %117 : vector<1x128xf32>
    %119 = math.rsqrt %118 : vector<1x128xf32>
    %120 = arith.mulf %93, %119 : vector<1x128xf32>
    %121 = arith.mulf %111, %120 : vector<1x128xf32>
    %122 = arith.subf %94, %121 : vector<1x128xf32>
    %123 = vector.broadcast %120 : vector<1x128xf32> to vector<32x128xf32>
    %124 = arith.mulf %92, %123 : vector<32x128xf32>
    %125 = vector.broadcast %122 : vector<1x128xf32> to vector<32x128xf32>
    %126 = arith.addf %124, %125 : vector<32x128xf32>
    %c0_59 = arith.constant 0 : index
    %c0_60 = arith.constant 0 : index
    %127 = vector.load %arg8[%c0_59, %c0_60] : memref<32x128xf32, #tpu.memory_space<vmem>>, vector<32x128xf32>
    %128 = arith.addf %126, %127 : vector<32x128xf32>
    %cst_61 = arith.constant 0.000000e+00 : f32
    %129 = vector.broadcast %cst_61 : f32 to vector<32x128xf32>
    %130 = arith.maximumf %128, %129 : vector<32x128xf32>
    %c0_62 = arith.constant 0 : index
    %c0_63 = arith.constant 0 : index
    %131 = vector.load %arg8[%c0_62, %c0_63] : memref<32x128xf32, #tpu.memory_space<vmem>>, vector<32x128xf32>
    tpu.vector_store %arg8[%c0_62, %c0_63], %130 {strides = array<i32>} : memref<32x128xf32, #tpu.memory_space<vmem>>, vector<32x128xf32>,
    return
  }
}

</mosaic_0001>

<llo_original>
// kernel: tile.22
$region0: #{tile.22}
  #allocation0 [shape = 's32[1]{0}', space=sflag, size = 0x4, scoped, tag = 'scoped memory for tile.22']
  %s0 = inlined_call_operand.vmem [shape: f32[8], index: 0, kind: input, shape index: {}]
  %s1 = inlined_call_operand.vmem [shape: f32[16,8], index: 1, kind: output, shape index: {}]
  // Predicated region
  $region2: #{tile.22} parent=0 // pred_check
    _
  $region3: #{tile.22} parent=0 // pred_check_branch
    %3 = sbr.rel (0) target = $region5
  $region4: #{tile.22} parent=0 // pred_region
    _
  $region5: #{tile.22} parent=0 // pred_fallthru
    _
  %v4 = vld [vmem:[%s0] ss:$0 sm:$0xff]
  %5 = vst [vmem:[%s1] sm:$0xff] %v4
  %s6 = scalar_lea.vmem %s1, 8
  %7 = vst [vmem:[%s6] sm:$0xff] %v4

// kernel: tile.23
$region0: #{tile.23}
  %s0 = inlined_call_operand.vmem [shape: f32[16,8], index: 0, kind: input, shape index: {}]
  %s1 = inlined_call_operand.vmem [shape: f32[1,128], index: 1, kind: output, shape index: {}]
  $region1: #{tile.23} parent=0
    #allocation0 [shape = 'u8[4096]{0}', space=vmem, size = 0x1000, scoped, tag = 'scoped mem for output reshape']
    %v2 = vld [vmem:[%s0] sm:$0x1]
    %vm3 = vcmask 64512
    %4 = vst.msk [vmem:[#allocation0] sm:$0x1] %vm3, %v2
    %s5 = scalar_lea.vmem %s0, 15
    %v6 = vld [vmem:[%s5] sm:$0x1]
    %7 = vrot.lane.b32.xlu0 %v6, 120
    %v8 = vpop.permute.xlu0 %7
    %vm9 = vcmask 1048512
    %10 = vst.msk [vmem:[#allocation0] sm:$0x1] %vm9, %v8
    %s11 = scalar_lea.vmem %s0, 14
    %v12 = vld [vmem:[%s11] sm:$0x1]
    %13 = vrot.lane.b32.xlu0 %v12, 112
    %v14 = vpop.permute.xlu0 %13
    %vm15 = vcmask 982912
    %16 = vst.msk [vmem:[#allocation0] sm:$0x1] %vm15, %v14
    %s17 = scalar_lea.vmem %s0, 13
    %v18 = vld [vmem:[%s17] sm:$0x1]
    %19 = vrot.lane.b32.xlu0 %v18, 104
    %v20 = vpop.permute.xlu0 %19
    %vm21 = vcmask 917312
    %22 = vst.msk [vmem:[#allocation0] sm:$0x1] %vm21, %v20
    %s23 = scalar_lea.vmem %s0, 12
    %v24 = vld [vmem:[%s23] sm:$0x1]
    %25 = vrot.lane.b32.xlu0 %v24, 96
    %v26 = vpop.permute.xlu0 %25
    %vm27 = vcmask 851712
    %28 = vst.msk [vmem:[#allocation0] sm:$0x1] %vm27, %v26
    %s29 = scalar_lea.vmem %s0, 11
    %v30 = vld [vmem:[%s29] sm:$0x1]
    %31 = vrot.lane.b32.xlu0 %v30, 88
    %v32 = vpop.permute.xlu0 %31
    %vm33 = vcmask 786112
    %34 = vst.msk [vmem:[#allocation0] sm:$0x1] %vm33, %v32
    %s35 = scalar_lea.vmem %s0, 10
    %v36 = vld [vmem:[%s35] sm:$0x1]
    %37 = vrot.lane.b32.xlu0 %v36, 80
    %v38 = vpop.permute.xlu0 %37
    %vm39 = vcmask 720512
    %40 = vst.msk [vmem:[#allocation0] sm:$0x1] %vm39, %v38
    %s41 = scalar_lea.vmem %s0, 9
    %v42 = vld [vmem:[%s41] sm:$0x1]
    %43 = vrot.lane.b32.xlu0 %v42, 72
    %v44 = vpop.permute.xlu0 %43
    %vm45 = vcmask 654912
    %46 = vst.msk [vmem:[#allocation0] sm:$0x1] %vm45, %v44
    %s47 = scalar_lea.vmem %s0, 8
    %v48 = vld [vmem:[%s47] sm:$0x1]
    %49 = vrot.lane.b32.xlu0 %v48, 64
    %v50 = vpop.permute.xlu0 %49
    %vm51 = vcmask 589312
    %52 = vst.msk [vmem:[#allocation0] sm:$0x1] %vm51, %v50
    %s53 = scalar_lea.vmem %s0, 7
    %v54 = vld [vmem:[%s53] sm:$0x1]
    %55 = vrot.lane.b32.xlu0 %v54, 56
    %v56 = vpop.permute.xlu0 %55
    %vm57 = vcmask 523712
    %58 = vst.msk [vmem:[#allocation0] sm:$0x1] %vm57, %v56
    %s59 = scalar_lea.vmem %s0, 6
    %v60 = vld [vmem:[%s59] sm:$0x1]
    %61 = vrot.lane.b32.xlu0 %v60, 48
    %v62 = vpop.permute.xlu0 %61
    %vm63 = vcmask 458112
    %64 = vst.msk [vmem:[#allocation0] sm:$0x1] %vm63, %v62
    %s65 = scalar_lea.vmem %s0, 5
    %v66 = vld [vmem:[%s65] sm:$0x1]
    %67 = vrot.lane.b32.xlu0 %v66, 40
    %v68 = vpop.permute.xlu0 %67
    %vm69 = vcmask 392512
    %70 = vst.msk [vmem:[#allocation0] sm:$0x1] %vm69, %v68
    %s71 = scalar_lea.vmem %s0, 4
    %v72 = vld [vmem:[%s71] sm:$0x1]
    %73 = vrot.lane.b32.xlu0 %v72, 32
    %v74 = vpop.permute.xlu0 %73
    %vm75 = vcmask 326912
    %76 = vst.msk [vmem:[#allocation0] sm:$0x1] %vm75, %v74
    %s77 = scalar_lea.vmem %s0, 3
    %v78 = vld [vmem:[%s77] sm:$0x1]
    %79 = vrot.lane.b32.xlu0 %v78, 24
    %v80 = vpop.permute.xlu0 %79
    %vm81 = vcmask 261312
    %82 = vst.msk [vmem:[#allocation0] sm:$0x1] %vm81, %v80
    %s83 = scalar_lea.vmem %s0, 2
    %v84 = vld [vmem:[%s83] sm:$0x1]
    %85 = vrot.lane.b32.xlu0 %v84, 16
    %v86 = vpop.permute.xlu0 %85
    %vm87 = vcmask 195712
    %88 = vst.msk [vmem:[#allocation0] sm:$0x1] %vm87, %v86
    %s89 = scalar_lea.vmem %s0, 1
    %v90 = vld [vmem:[%s89] sm:$0x1]
    %91 = vrot.lane.b32.xlu0 %v90, 8
    %v92 = vpop.permute.xlu0 %91
    %vm93 = vcmask 130112
    %94 = vst.msk [vmem:[#allocation0] sm:$0x1] %vm93, %v92
    %s96 = ssub.s32 2, 1
    %v97 = vld [vmem:[#allocation0] sm:%s96]
    %s99 = ssub.s32 2, 1
    %100 = vst [vmem:[%s1] sm:%s99] %v97

// kernel: basic_block_pallas.1
$region0: #{basic_block_pallas.1}
  #allocation0 [shape = 'u32[]', space=smem, size = 0x4, offset = 0x4, fixed_abs, tag = 'smem constant byte address 0x4 - core index']
  #allocation1 [shape = 'u32[72,128]{1,0:T(1,128)}', space=vmem, size = 0x9000, scoped, tag = 'internal scratch']
  #allocation2 [shape = 'f32[32,128]{1,0:T(8,128)}', space=vmem, size = 0x4000, scoped, tag = 'scratch operand']
  #allocation3 [shape = 'f32[36,128]{1,0:T(8,128)}', space=vmem, size = 0x5000, scoped, tag = 'scratch operand']
  %s0 = inlined_call_operand.vmem [shape: f32[36,64], index: 0, kind: input, shape index: {}]
  %s1 = inlined_call_operand.vmem [shape: f32[64,512], index: 1, kind: input, shape index: {}]
  %s2 = inlined_call_operand.vmem [shape: f32[128,384], index: 2, kind: input, shape index: {}]
  %s3 = inlined_call_operand.vmem [shape: f32[1,128], index: 3, kind: input, shape index: {}]
  %s4 = inlined_call_operand.vmem [shape: f32[1,128], index: 4, kind: input, shape index: {}]
  %s5 = inlined_call_operand.vmem [shape: f32[1,128], index: 5, kind: input, shape index: {}]
  %s6 = inlined_call_operand.vmem [shape: f32[1,128], index: 6, kind: input, shape index: {}]
  %s7 = inlined_call_operand.vmem [shape: f32[1,128], index: 7, kind: input, shape index: {}]
  %s8 = inlined_call_operand.vmem [shape: f32[32,128], index: 8, kind: output, shape index: {}]
  %s9 = sld [smem:[#allocation0]]
  $region42: #{basic_block_pallas.1} parent=0
    _
  %s11 = ssub.s32 1, %s9
  %s12 = scalar_select 0, %s11, %s9
  // Predicated region
  $region2: #{basic_block_pallas.1} parent=0 // pred_check
    _
  $region3: #{basic_block_pallas.1} parent=0 // pred_check_branch
    %14 = sbr.rel (0) target = $region5
  $region4: #{basic_block_pallas.1} parent=0 // pred_region
    _
  $region5: #{basic_block_pallas.1} parent=0 // pred_fallthru
    _
  // Predicated region
  $region6: #{basic_block_pallas.1} parent=0 // pred_check
    _
  $region7: #{basic_block_pallas.1} parent=0 // pred_check_branch
    %16 = sbr.rel (0) target = $region9
  $region8: #{basic_block_pallas.1} parent=0 // pred_region
    _
  $region9: #{basic_block_pallas.1} parent=0 // pred_fallthru
    _
  // Predicated region
  $region10: #{basic_block_pallas.1} parent=0 // pred_check
    _
  $region11: #{basic_block_pallas.1} parent=0 // pred_check_branch
    %18 = sbr.rel (0) target = $region13
  $region12: #{basic_block_pallas.1} parent=0 // pred_region
    _
  $region13: #{basic_block_pallas.1} parent=0 // pred_fallthru
    _
  // Predicated region
  $region14: #{basic_block_pallas.1} parent=0 // pred_check
    _
  $region15: #{basic_block_pallas.1} parent=0 // pred_check_branch
    %20 = sbr.rel (0) target = $region17
  $region16: #{basic_block_pallas.1} parent=0 // pred_region
    _
  $region17: #{basic_block_pallas.1} parent=0 // pred_fallthru
    _
  // Predicated region
  $region18: #{basic_block_pallas.1} parent=0 // pred_check
    _
  $region19: #{basic_block_pallas.1} parent=0 // pred_check_branch
    %22 = sbr.rel (0) target = $region21
  $region20: #{basic_block_pallas.1} parent=0 // pred_region
    _
  $region21: #{basic_block_pallas.1} parent=0 // pred_fallthru
    _
  // Predicated region
  $region22: #{basic_block_pallas.1} parent=0 // pred_check
    _
  $region23: #{basic_block_pallas.1} parent=0 // pred_check_branch
    %24 = sbr.rel (0) target = $region25
  $region24: #{basic_block_pallas.1} parent=0 // pred_region
    _
  $region25: #{basic_block_pallas.1} parent=0 // pred_fallthru
    _
  // Predicated region
  $region26: #{basic_block_pallas.1} parent=0 // pred_check
    _
  $region27: #{basic_block_pallas.1} parent=0 // pred_check_branch
    %26 = sbr.rel (0) target = $region29
  $region28: #{basic_block_pallas.1} parent=0 // pred_region
    _
  $region29: #{basic_block_pallas.1} parent=0 // pred_fallthru
    _
  // Predicated region
  $region30: #{basic_block_pallas.1} parent=0 // pred_check
    _
  $region31: #{basic_block_pallas.1} parent=0 // pred_check_branch
    %28 = sbr.rel (0) target = $region33
  $region32: #{basic_block_pallas.1} parent=0 // pred_region
    _
  $region33: #{basic_block_pallas.1} parent=0 // pred_fallthru
    _
  %v29 = vld [vmem:[%s0] sm:$0xff]
  %v30 = vld [vmem:[%s0 + $0x8] sm:$0xff]
  %v31 = vld [vmem:[%s0 + $0x10] sm:$0xff]
  %v32 = vld [vmem:[%s0 + $0x18] sm:$0xff]
  %v33 = vld [vmem:[%s0 + $0x20] sm:$0xf]
  %v34 = vld [vmem:[%s1] sm:$0xff]
  %v35 = vld [vmem:[%s1 + $0x8] sm:$0xff]
  %v36 = vld [vmem:[%s1 + $0x10] sm:$0xff]
  %v37 = vld [vmem:[%s1 + $0x18] sm:$0xff]
  %v38 = vld [vmem:[%s1 + $0x20] sm:$0xff]
  %v39 = vld [vmem:[%s1 + $0x28] sm:$0xff]
  %v40 = vld [vmem:[%s1 + $0x30] sm:$0xff]
  %v41 = vld [vmem:[%s1 + $0x38] sm:$0xff]
  %v42 = vld [vmem:[%s1 + $0x40] sm:$0xff]
  %v43 = vld [vmem:[%s1 + $0x48] sm:$0xff]
  %v44 = vld [vmem:[%s1 + $0x50] sm:$0xff]
  %v45 = vld [vmem:[%s1 + $0x58] sm:$0xff]
  %v46 = vld [vmem:[%s1 + $0x60] sm:$0xff]
  %v47 = vld [vmem:[%s1 + $0x68] sm:$0xff]
  %v48 = vld [vmem:[%s1 + $0x70] sm:$0xff]
  %v49 = vld [vmem:[%s1 + $0x78] sm:$0xff]
  %v50 = vld [vmem:[%s1 + $0x80] sm:$0xff]
  %v51 = vld [vmem:[%s1 + $0x88] sm:$0xff]
  %v52 = vld [vmem:[%s1 + $0x90] sm:$0xff]
  %v53 = vld [vmem:[%s1 + $0x98] sm:$0xff]
  %v54 = vld [vmem:[%s1 + $0xa0] sm:$0xff]
  %v55 = vld [vmem:[%s1 + $0xa8] sm:$0xff]
  %v56 = vld [vmem:[%s1 + $0xb0] sm:$0xff]
  %v57 = vld [vmem:[%s1 + $0xb8] sm:$0xff]
  %v58 = vld [vmem:[%s1 + $0xc0] sm:$0xff]
  %v59 = vld [vmem:[%s1 + $0xc8] sm:$0xff]
  %v60 = vld [vmem:[%s1 + $0xd0] sm:$0xff]
  %v61 = vld [vmem:[%s1 + $0xd8] sm:$0xff]
  %v62 = vld [vmem:[%s1 + $0xe0] sm:$0xff]
  %v63 = vld [vmem:[%s1 + $0xe8] sm:$0xff]
  %v64 = vld [vmem:[%s1 + $0xf0] sm:$0xff]
  %v65 = vld [vmem:[%s1 + $0xf8] sm:$0xff]
  %vm66 = vcmask 523264
  %v68 = vsel %vm66, %v29, 0
  %v71 = vsel %vm66, %v30, 0
  %v74 = vsel %vm66, %v31, 0
  %v77 = vsel %vm66, %v32, 0
  %v80 = vsel %vm66, %v33, 0
  %82 = vmatpush.msra.mxu0 0.0
  %83 = vmatpush.msra.mxu0 0.0
  %84 = vmatpush.msra.mxu0 0.0
  %85 = vmatpush.msra.mxu0 0.0
  %86 = vmatpush.msra.mxu0 0.0
  %87 = vmatpush.msra.mxu0 0.0
  %88 = vmatpush.msra.mxu0 0.0
  %89 = vmatpush.msra.mxu0 0.0
  %90 = vmatpush.msra.mxu0 %v62
  %91 = vmatpush.msra.mxu0 %v58
  %92 = vmatpush.msra.mxu0 %v54
  %93 = vmatpush.msra.mxu0 %v50
  %94 = vmatpush.msra.mxu0 %v46
  %95 = vmatpush.msra.mxu0 %v42
  %96 = vmatpush.msra.mxu0 %v38
  %97 = vmatpush.msra.mxu0 %v34
  %98 = vmatmul.f32.gmra.mxu0 %v68
  %v99 = vpop.f32.mrf.mxu0
  %v100 = vadd.f32 0.0, %v99
  %101 = vmatmul.f32.gmra.mxu0 %v71
  %v102 = vpop.f32.mrf.mxu0
  %v103 = vadd.f32 0.0, %v102
  %104 = vmatmul.f32.gmra.mxu0 %v74
  %v105 = vpop.f32.mrf.mxu0
  %v106 = vadd.f32 0.0, %v105
  %107 = vmatmul.f32.gmra.mxu0 %v77
  %v108 = vpop.f32.mrf.mxu0
  %v109 = vadd.f32 0.0, %v108
  %110 = vmatmul.f32.gmra.mxu0 %v80
  %v111 = vpop.f32.mrf.mxu0
  %v112 = vadd.f32 0.0, %v111
  %113 = vdwg.mxu0
  %114 = vmatpush.msra.mxu0 0.0
  %115 = vmatpush.msra.mxu0 0.0
  %116 = vmatpush.msra.mxu0 0.0
  %117 = vmatpush.msra.mxu0 0.0
  %118 = vmatpush.msra.mxu0 0.0
  %119 = vmatpush.msra.mxu0 0.0
  %120 = vmatpush.msra.mxu0 0.0
  %121 = vmatpush.msra.mxu0 0.0
  %122 = vmatpush.msra.mxu0 %v63
  %123 = vmatpush.msra.mxu0 %v59
  %124 = vmatpush.msra.mxu0 %v55
  %125 = vmatpush.msra.mxu0 %v51
  %126 = vmatpush.msra.mxu0 %v47
  %127 = vmatpush.msra.mxu0 %v43
  %128 = vmatpush.msra.mxu0 %v39
  %129 = vmatpush.msra.mxu0 %v35
  %130 = vmatmul.f32.gmra.mxu0 %v68
  %v131 = vpop.f32.mrf.mxu0
  %v132 = vadd.f32 0.0, %v131
  %133 = vmatmul.f32.gmra.mxu0 %v71
  %v134 = vpop.f32.mrf.mxu0
  %v135 = vadd.f32 0.0, %v134
  %136 = vmatmul.f32.gmra.mxu0 %v74
  %v137 = vpop.f32.mrf.mxu0
  %v138 = vadd.f32 0.0, %v137
  %139 = vmatmul.f32.gmra.mxu0 %v77
  %v140 = vpop.f32.mrf.mxu0
  %v141 = vadd.f32 0.0, %v140
  %142 = vmatmul.f32.gmra.mxu0 %v80
  %v143 = vpop.f32.mrf.mxu0
  %v144 = vadd.f32 0.0, %v143
  %145 = vdwg.mxu0
  %146 = vmatpush.msra.mxu0 0.0
  %147 = vmatpush.msra.mxu0 0.0
  %148 = vmatpush.msra.mxu0 0.0
  %149 = vmatpush.msra.mxu0 0.0
  %150 = vmatpush.msra.mxu0 0.0
  %151 = vmatpush.msra.mxu0 0.0
  %152 = vmatpush.msra.mxu0 0.0
  %153 = vmatpush.msra.mxu0 0.0
  %154 = vmatpush.msra.mxu0 %v64
  %155 = vmatpush.msra.mxu0 %v60
  %156 = vmatpush.msra.mxu0 %v56
  %157 = vmatpush.msra.mxu0 %v52
  %158 = vmatpush.msra.mxu0 %v48
  %159 = vmatpush.msra.mxu0 %v44
  %160 = vmatpush.msra.mxu0 %v40
  %161 = vmatpush.msra.mxu0 %v36
  %162 = vmatmul.f32.gmra.mxu0 %v68
  %v163 = vpop.f32.mrf.mxu0
  %v164 = vadd.f32 0.0, %v163
  %165 = vmatmul.f32.gmra.mxu0 %v71
  %v166 = vpop.f32.mrf.mxu0
  %v167 = vadd.f32 0.0, %v166
  %168 = vmatmul.f32.gmra.mxu0 %v74
  %v169 = vpop.f32.mrf.mxu0
  %v170 = vadd.f32 0.0, %v169
  %171 = vmatmul.f32.gmra.mxu0 %v77
  %v172 = vpop.f32.mrf.mxu0
  %v173 = vadd.f32 0.0, %v172
  %174 = vmatmul.f32.gmra.mxu0 %v80
  %v175 = vpop.f32.mrf.mxu0
  %v176 = vadd.f32 0.0, %v175
  %177 = vdwg.mxu0
  %178 = vmatpush.msra.mxu0 0.0
  %179 = vmatpush.msra.mxu0 0.0
  %180 = vmatpush.msra.mxu0 0.0
  %181 = vmatpush.msra.mxu0 0.0
  %182 = vmatpush.msra.mxu0 0.0
  %183 = vmatpush.msra.mxu0 0.0
  %184 = vmatpush.msra.mxu0 0.0
  %185 = vmatpush.msra.mxu0 0.0
  %186 = vmatpush.msra.mxu0 %v65
  %187 = vmatpush.msra.mxu0 %v61
  %188 = vmatpush.msra.mxu0 %v57
  %189 = vmatpush.msra.mxu0 %v53
  %190 = vmatpush.msra.mxu0 %v49
  %191 = vmatpush.msra.mxu0 %v45
  %192 = vmatpush.msra.mxu0 %v41
  %193 = vmatpush.msra.mxu0 %v37
  %194 = vmatmul.f32.gmra.mxu0 %v68
  %v195 = vpop.f32.mrf.mxu0
  %v196 = vadd.f32 0.0, %v195
  %197 = vmatmul.f32.gmra.mxu0 %v71
  %v198 = vpop.f32.mrf.mxu0
  %v199 = vadd.f32 0.0, %v198
  %200 = vmatmul.f32.gmra.mxu0 %v74
  %v201 = vpop.f32.mrf.mxu0
  %v202 = vadd.f32 0.0, %v201
  %203 = vmatmul.f32.gmra.mxu0 %v77
  %v204 = vpop.f32.mrf.mxu0
  %v205 = vadd.f32 0.0, %v204
  %206 = vmatmul.f32.gmra.mxu0 %v80
  %v207 = vpop.f32.mrf.mxu0
  %v208 = vadd.f32 0.0, %v207
  %209 = vdwg.mxu0
  %vm213 = vcmask 1046528
  %v214 = vrot.slane %v132, 1
  %v215 = vrot.slane %v135, 1
  %v216 = vsel %vm213, %v214, %v215
  %v217 = vrot.slane %v138, 1
  %v218 = vsel %vm213, %v215, %v217
  %v221 = vadd.f32 %v100, %v216
  %v222 = vadd.f32 %v103, %v218
  %vm226 = vcmask 1045504
  %v227 = vrot.slane %v164, 2
  %v228 = vrot.slane %v167, 2
  %v229 = vsel %vm226, %v227, %v228
  %v230 = vrot.slane %v170, 2
  %v231 = vsel %vm226, %v228, %v230
  %v234 = vadd.f32 %v221, %v229
  %v235 = vadd.f32 %v222, %v231
  %236 = vst [vmem:[#allocation2] sm:$0xff] %v234
  %237 = vst [vmem:[#allocation2 + $0x8] sm:$0xff] %v235
  %v238 = vld [vmem:[%s3] sm:$0x1]
  %v240 = vperm.slane %v238, 0
  %v242 = vadd.f32 %v196, %v240
  %v243 = vadd.f32 %v199, %v240
  %v244 = vadd.f32 %v202, %v240
  %245 = vst [vmem:[%s8 - $0x1] sm:$0xfe] %v242
  %246 = vst [vmem:[%s8 + $0x7] sm:$0xff] %v243
  %247 = vst [vmem:[%s8 + $0xf] sm:$0x1] %v244
  %v250 = vrot.slane %v141, 1
  %v251 = vsel %vm213, %v217, %v250
  %v252 = vrot.slane %v144, 1
  %v253 = vsel %vm213, %v250, %v252
  %v257 = vadd.f32 %v106, %v251
  %v258 = vadd.f32 %v109, %v253
  %v259 = vadd.f32 %v112, %v252
  %v262 = vrot.slane %v173, 2
  %v263 = vsel %vm226, %v230, %v262
  %v264 = vrot.slane %v176, 2
  %v265 = vsel %vm226, %v262, %v264
  %v269 = vadd.f32 %v257, %v263
  %v270 = vadd.f32 %v258, %v265
  %v271 = vadd.f32 %v259, %v264
  %272 = vst [vmem:[#allocation2 + $0xe] sm:$0xfc] %v269
  %273 = vst [vmem:[#allocation2 + $0x16] sm:$0xff] %v270
  %274 = vst [vmem:[#allocation2 + $0x1e] sm:$0x3] %v271
  %v275 = vld [vmem:[%s3] sm:$0x1]
  %v277 = vperm.slane %v275, 0
  %v279 = vadd.f32 %v202, %v277
  %v280 = vadd.f32 %v205, %v277
  %v281 = vadd.f32 %v208, %v277
  %282 = vst [vmem:[%s8 + $0xd] sm:$0xf8] %v279
  %283 = vst [vmem:[%s8 + $0x15] sm:$0xff] %v280
  %284 = vst [vmem:[%s8 + $0x1d] sm:$0x7] %v281
  %v285 = vld [vmem:[#allocation2] sm:$0xff]
  %v286 = vld [vmem:[#allocation2 + $0x8] sm:$0xff]
  %v287 = vld [vmem:[#allocation2 + $0x10] sm:$0xff]
  %v288 = vld [vmem:[#allocation2 + $0x18] sm:$0xff]
  %v289 = vld [vmem:[%s4] sm:$0x1]
  %v290 = vld [vmem:[%s5] sm:$0x1]
  %v291 = vadd.f32 %v285, %v286
  %v292 = vadd.f32 %v291, %v287
  %v293 = vadd.f32 %v292, %v288
  %v294 = vrot.slane %v293, 4
  %v295 = vadd.f32 %v293, %v294
  %v296 = vrot.slane %v295, 2
  %v297 = vadd.f32 %v295, %v296
  %v298 = vrot.slane %v297, 1
  %v299 = vadd.f32 %v297, %v298
  %v300 = vmul.f32 %v285, %v285
  %v301 = vmul.f32 %v286, %v286
  %v302 = vmul.f32 %v287, %v287
  %v303 = vmul.f32 %v288, %v288
  %v304 = vadd.f32 %v300, %v301
  %v305 = vadd.f32 %v304, %v302
  %v306 = vadd.f32 %v305, %v303
  %v307 = vrot.slane %v306, 4
  %v308 = vadd.f32 %v306, %v307
  %v309 = vrot.slane %v308, 2
  %v310 = vadd.f32 %v308, %v309
  %v311 = vrot.slane %v310, 1
  %v312 = vadd.f32 %v310, %v311
  %vm313 = vcmask 1040384
  %v314 = vsel %vm313, %v299, %v312
  %315 = vrot.lane.b32.xlu0 %v314, 8
  %v316 = vpop.permute.xlu0 %315
  %v317 = vadd.f32 %v314, %v316
  %318 = vrot.lane.b32.xlu0 %v317, 16
  %v319 = vpop.permute.xlu0 %318
  %v320 = vadd.f32 %v317, %v319
  %321 = vrot.lane.b32.xlu0 %v320, 32
  %v322 = vpop.permute.xlu0 %321
  %v323 = vadd.f32 %v320, %v322
  %324 = vrot.lane.b32.xlu0 %v323, 64
  %v325 = vpop.permute.xlu0 %324
  %v326 = vadd.f32 %v323, %v325
  %v327 = vmul.f32 %v326, 0.001953125
  %v328 = vmul.f32 %v327, %v327
  %v330 = vrot.slane %v328, 7
  %v332 = vsub.f32 %v327, %v330
  %v333 = vadd.f32 %v332, 1e-05
  %v334 = vrsqrt.pop %v333
  %v335 = vmul.f32 %v334, %v333
  %v336 = vmul.f32 %v335, %v334
  %v337 = vmul.f32 0.5, %v336
  %v338 = vsub.f32 1.5, %v337
  %v339 = vmul.f32 %v334, %v338
  %vm340 = vweird.f32 %v333
  %vm341 = vweird.f32 %v334
  %vm342 = vmor %vm340, %vm341
  %v343 = vsel %vm342, %v334, %v339
  %345 = vst [vmem:[#allocation1] sm:$0xff] %v343
  %s346 = scalar_lea.vmem [#allocation1], 1
  %v347 = vld [vmem:[%s346] ss:$9 sm:$0xff]
  %v349 = vmul.f32 %v289, %v347
  %v350 = vmul.f32 %v327, %v349
  %v351 = vsub.f32 %v290, %v350
  %352 = vst [vmem:[#allocation3] sm:$0x1] 0.0
  %353 = vst [vmem:[#allocation3 + $0x11] sm:$0x1] 0.0
  %v355 = vperm.slane %v349, 0
  %v357 = vmul.f32 %v285, %v355
  %v358 = vmul.f32 %v286, %v355
  %v360 = vperm.slane %v351, 0
  %v362 = vadd.f32 %v357, %v360
  %v363 = vadd.f32 %v358, %v360
  %v364 = vmax.f32 %v362, 0.0
  %v365 = vmax.f32 %v363, 0.0
  %366 = vst [vmem:[#allocation3 + $0x1] sm:$0xff] %v364
  %367 = vst [vmem:[#allocation3 + $0x9] sm:$0xff] %v365
  %368 = vst [vmem:[#allocation3 + $0x12] sm:$0x1] 0.0
  %369 = vst [vmem:[#allocation3 + $0x23] sm:$0x1] 0.0
  %v370 = vmul.f32 %v287, %v355
  %v371 = vmul.f32 %v288, %v355
  %v372 = vadd.f32 %v370, %v360
  %v373 = vadd.f32 %v371, %v360
  %v374 = vmax.f32 %v372, 0.0
  %v375 = vmax.f32 %v373, 0.0
  %376 = vst [vmem:[#allocation3 + $0x13] sm:$0xff] %v374
  %377 = vst [vmem:[#allocation3 + $0x1b] sm:$0xff] %v375
  %v378 = vld [vmem:[#allocation3] sm:$0xff]
  %v379 = vld [vmem:[#allocation3 + $0x8] sm:$0xff]
  %v380 = vld [vmem:[#allocation3 + $0x10] sm:$0xff]
  %v381 = vld [vmem:[#allocation3 + $0x18] sm:$0xff]
  %v382 = vld [vmem:[#allocation3 + $0x20] sm:$0xf]
  %v383 = vld [vmem:[%s2] sm:$0xff]
  %v384 = vld [vmem:[%s2 + $0x8] sm:$0xff]
  %v385 = vld [vmem:[%s2 + $0x10] sm:$0xff]
  %v386 = vld [vmem:[%s2 + $0x18] sm:$0xff]
  %v387 = vld [vmem:[%s2 + $0x20] sm:$0xff]
  %v388 = vld [vmem:[%s2 + $0x28] sm:$0xff]
  %v389 = vld [vmem:[%s2 + $0x30] sm:$0xff]
  %v390 = vld [vmem:[%s2 + $0x38] sm:$0xff]
  %v391 = vld [vmem:[%s2 + $0x40] sm:$0xff]
  %v392 = vld [vmem:[%s2 + $0x48] sm:$0xff]
  %v393 = vld [vmem:[%s2 + $0x50] sm:$0xff]
  %v394 = vld [vmem:[%s2 + $0x58] sm:$0xff]
  %v395 = vld [vmem:[%s2 + $0x60] sm:$0xff]
  %v396 = vld [vmem:[%s2 + $0x68] sm:$0xff]
  %v397 = vld [vmem:[%s2 + $0x70] sm:$0xff]
  %v398 = vld [vmem:[%s2 + $0x78] sm:$0xff]
  %v399 = vld [vmem:[%s2 + $0x80] sm:$0xff]
  %v400 = vld [vmem:[%s2 + $0x88] sm:$0xff]
  %v401 = vld [vmem:[%s2 + $0x90] sm:$0xff]
  %v402 = vld [vmem:[%s2 + $0x98] sm:$0xff]
  %v403 = vld [vmem:[%s2 + $0xa0] sm:$0xff]
  %v404 = vld [vmem:[%s2 + $0xa8] sm:$0xff]
  %v405 = vld [vmem:[%s2 + $0xb0] sm:$0xff]
  %v406 = vld [vmem:[%s2 + $0xb8] sm:$0xff]
  %v407 = vld [vmem:[%s2 + $0xc0] sm:$0xff]
  %v408 = vld [vmem:[%s2 + $0xc8] sm:$0xff]
  %v409 = vld [vmem:[%s2 + $0xd0] sm:$0xff]
  %v410 = vld [vmem:[%s2 + $0xd8] sm:$0xff]
  %v411 = vld [vmem:[%s2 + $0xe0] sm:$0xff]
  %v412 = vld [vmem:[%s2 + $0xe8] sm:$0xff]
  %v413 = vld [vmem:[%s2 + $0xf0] sm:$0xff]
  %v414 = vld [vmem:[%s2 + $0xf8] sm:$0xff]
  %v415 = vld [vmem:[%s2 + $0x100] sm:$0xff]
  %v416 = vld [vmem:[%s2 + $0x108] sm:$0xff]
  %v417 = vld [vmem:[%s2 + $0x110] sm:$0xff]
  %v418 = vld [vmem:[%s2 + $0x118] sm:$0xff]
  %v419 = vld [vmem:[%s2 + $0x120] sm:$0xff]
  %v420 = vld [vmem:[%s2 + $0x128] sm:$0xff]
  %v421 = vld [vmem:[%s2 + $0x130] sm:$0xff]
  %v422 = vld [vmem:[%s2 + $0x138] sm:$0xff]
  %v423 = vld [vmem:[%s2 + $0x140] sm:$0xff]
  %v424 = vld [vmem:[%s2 + $0x148] sm:$0xff]
  %v425 = vld [vmem:[%s2 + $0x150] sm:$0xff]
  %v426 = vld [vmem:[%s2 + $0x158] sm:$0xff]
  %v427 = vld [vmem:[%s2 + $0x160] sm:$0xff]
  %v428 = vld [vmem:[%s2 + $0x168] sm:$0xff]
  %v429 = vld [vmem:[%s2 + $0x170] sm:$0xff]
  %v430 = vld [vmem:[%s2 + $0x178] sm:$0xff]
  %431 = vmatpush.msra.mxu0 %v428
  %432 = vmatpush.msra.mxu0 %v425
  %433 = vmatpush.msra.mxu0 %v422
  %434 = vmatpush.msra.mxu0 %v419
  %435 = vmatpush.msra.mxu0 %v416
  %436 = vmatpush.msra.mxu0 %v413
  %437 = vmatpush.msra.mxu0 %v410
  %438 = vmatpush.msra.mxu0 %v407
  %439 = vmatpush.msra.mxu0 %v404
  %440 = vmatpush.msra.mxu0 %v401
  %441 = vmatpush.msra.mxu0 %v398
  %442 = vmatpush.msra.mxu0 %v395
  %443 = vmatpush.msra.mxu0 %v392
  %444 = vmatpush.msra.mxu0 %v389
  %445 = vmatpush.msra.mxu0 %v386
  %446 = vmatpush.msra.mxu0 %v383
  %447 = vmatmul.f32.gmra.mxu0 %v378
  %v448 = vpop.f32.mrf.mxu0
  %v449 = vadd.f32 0.0, %v448
  %450 = vmatmul.f32.gmra.mxu0 %v379
  %v451 = vpop.f32.mrf.mxu0
  %v452 = vadd.f32 0.0, %v451
  %453 = vmatmul.f32.gmra.mxu0 %v380
  %v454 = vpop.f32.mrf.mxu0
  %v455 = vadd.f32 0.0, %v454
  %456 = vmatmul.f32.gmra.mxu0 %v381
  %v457 = vpop.f32.mrf.mxu0
  %v458 = vadd.f32 0.0, %v457
  %459 = vmatmul.f32.gmra.mxu0 %v382
  %v460 = vpop.f32.mrf.mxu0
  %v461 = vadd.f32 0.0, %v460
  %462 = vdwg.mxu0
  %463 = vmatpush.msra.mxu0 %v429
  %464 = vmatpush.msra.mxu0 %v426
  %465 = vmatpush.msra.mxu0 %v423
  %466 = vmatpush.msra.mxu0 %v420
  %467 = vmatpush.msra.mxu0 %v417
  %468 = vmatpush.msra.mxu0 %v414
  %469 = vmatpush.msra.mxu0 %v411
  %470 = vmatpush.msra.mxu0 %v408
  %471 = vmatpush.msra.mxu0 %v405
  %472 = vmatpush.msra.mxu0 %v402
  %473 = vmatpush.msra.mxu0 %v399
  %474 = vmatpush.msra.mxu0 %v396
  %475 = vmatpush.msra.mxu0 %v393
  %476 = vmatpush.msra.mxu0 %v390
  %477 = vmatpush.msra.mxu0 %v387
  %478 = vmatpush.msra.mxu0 %v384
  %479 = vmatmul.f32.gmra.mxu0 %v378
  %v480 = vpop.f32.mrf.mxu0
  %v481 = vadd.f32 0.0, %v480
  %482 = vmatmul.f32.gmra.mxu0 %v379
  %v483 = vpop.f32.mrf.mxu0
  %v484 = vadd.f32 0.0, %v483
  %485 = vmatmul.f32.gmra.mxu0 %v380
  %v486 = vpop.f32.mrf.mxu0
  %v487 = vadd.f32 0.0, %v486
  %488 = vmatmul.f32.gmra.mxu0 %v381
  %v489 = vpop.f32.mrf.mxu0
  %v490 = vadd.f32 0.0, %v489
  %491 = vmatmul.f32.gmra.mxu0 %v382
  %v492 = vpop.f32.mrf.mxu0
  %v493 = vadd.f32 0.0, %v492
  %494 = vdwg.mxu0
  %495 = vmatpush.msra.mxu0 %v430
  %496 = vmatpush.msra.mxu0 %v427
  %497 = vmatpush.msra.mxu0 %v424
  %498 = vmatpush.msra.mxu0 %v421
  %499 = vmatpush.msra.mxu0 %v418
  %500 = vmatpush.msra.mxu0 %v415
  %501 = vmatpush.msra.mxu0 %v412
  %502 = vmatpush.msra.mxu0 %v409
  %503 = vmatpush.msra.mxu0 %v406
  %504 = vmatpush.msra.mxu0 %v403
  %505 = vmatpush.msra.mxu0 %v400
  %506 = vmatpush.msra.mxu0 %v397
  %507 = vmatpush.msra.mxu0 %v394
  %508 = vmatpush.msra.mxu0 %v391
  %509 = vmatpush.msra.mxu0 %v388
  %510 = vmatpush.msra.mxu0 %v385
  %511 = vmatmul.f32.gmra.mxu0 %v378
  %v512 = vpop.f32.mrf.mxu0
  %v513 = vadd.f32 0.0, %v512
  %514 = vmatmul.f32.gmra.mxu0 %v379
  %v515 = vpop.f32.mrf.mxu0
  %v516 = vadd.f32 0.0, %v515
  %517 = vmatmul.f32.gmra.mxu0 %v380
  %v518 = vpop.f32.mrf.mxu0
  %v519 = vadd.f32 0.0, %v518
  %520 = vmatmul.f32.gmra.mxu0 %v381
  %v521 = vpop.f32.mrf.mxu0
  %v522 = vadd.f32 0.0, %v521
  %523 = vmatmul.f32.gmra.mxu0 %v382
  %v524 = vpop.f32.mrf.mxu0
  %v525 = vadd.f32 0.0, %v524
  %526 = vdwg.mxu0
  %v530 = vrot.slane %v481, 1
  %v531 = vrot.slane %v484, 1
  %v532 = vsel %vm213, %v530, %v531
  %v533 = vrot.slane %v487, 1
  %v534 = vsel %vm213, %v531, %v533
  %v537 = vadd.f32 %v449, %v532
  %v538 = vadd.f32 %v452, %v534
  %v542 = vrot.slane %v513, 2
  %v543 = vrot.slane %v516, 2
  %v544 = vsel %vm226, %v542, %v543
  %v545 = vrot.slane %v519, 2
  %v546 = vsel %vm226, %v543, %v545
  %v549 = vadd.f32 %v537, %v544
  %v550 = vadd.f32 %v538, %v546
  %551 = vst [vmem:[#allocation2] sm:$0xff] %v549
  %552 = vst [vmem:[#allocation2 + $0x8] sm:$0xff] %v550
  %v555 = vrot.slane %v490, 1
  %v556 = vsel %vm213, %v533, %v555
  %v557 = vrot.slane %v493, 1
  %v558 = vsel %vm213, %v555, %v557
  %v562 = vadd.f32 %v455, %v556
  %v563 = vadd.f32 %v458, %v558
  %v564 = vadd.f32 %v461, %v557
  %v567 = vrot.slane %v522, 2
  %v568 = vsel %vm226, %v545, %v567
  %v569 = vrot.slane %v525, 2
  %v570 = vsel %vm226, %v567, %v569
  %v574 = vadd.f32 %v562, %v568
  %v575 = vadd.f32 %v563, %v570
  %v576 = vadd.f32 %v564, %v569
  %577 = vst [vmem:[#allocation2 + $0xe] sm:$0xfc] %v574
  %578 = vst [vmem:[#allocation2 + $0x16] sm:$0xff] %v575
  %579 = vst [vmem:[#allocation2 + $0x1e] sm:$0x3] %v576
  %v580 = vld [vmem:[#allocation2] sm:$0xff]
  %v581 = vld [vmem:[#allocation2 + $0x8] sm:$0xff]
  %v582 = vld [vmem:[#allocation2 + $0x10] sm:$0xff]
  %v583 = vld [vmem:[#allocation2 + $0x18] sm:$0xff]
  %v584 = vld [vmem:[%s6] sm:$0x1]
  %v585 = vld [vmem:[%s7] sm:$0x1]
  %v586 = vadd.f32 %v580, %v581
  %v587 = vadd.f32 %v586, %v582
  %v588 = vadd.f32 %v587, %v583
  %v589 = vrot.slane %v588, 4
  %v590 = vadd.f32 %v588, %v589
  %v591 = vrot.slane %v590, 2
  %v592 = vadd.f32 %v590, %v591
  %v593 = vrot.slane %v592, 1
  %v594 = vadd.f32 %v592, %v593
  %v595 = vmul.f32 %v580, %v580
  %v596 = vmul.f32 %v581, %v581
  %v597 = vmul.f32 %v582, %v582
  %v598 = vmul.f32 %v583, %v583
  %v599 = vadd.f32 %v595, %v596
  %v600 = vadd.f32 %v599, %v597
  %v601 = vadd.f32 %v600, %v598
  %v602 = vrot.slane %v601, 4
  %v603 = vadd.f32 %v601, %v602
  %v604 = vrot.slane %v603, 2
  %v605 = vadd.f32 %v603, %v604
  %v606 = vrot.slane %v605, 1
  %v607 = vadd.f32 %v605, %v606
  %v608 = vsel %vm313, %v594, %v607
  %609 = vrot.lane.b32.xlu0 %v608, 8
  %v610 = vpop.permute.xlu0 %609
  %v611 = vadd.f32 %v608, %v610
  %612 = vrot.lane.b32.xlu0 %v611, 16
  %v613 = vpop.permute.xlu0 %612
  %v614 = vadd.f32 %v611, %v613
  %615 = vrot.lane.b32.xlu0 %v614, 32
  %v616 = vpop.permute.xlu0 %615
  %v617 = vadd.f32 %v614, %v616
  %618 = vrot.lane.b32.xlu0 %v617, 64
  %v619 = vpop.permute.xlu0 %618
  %v620 = vadd.f32 %v617, %v619
  %v621 = vmul.f32 %v620, 0.001953125
  %v622 = vmul.f32 %v621, %v621
  %v624 = vrot.slane %v622, 7
  %v626 = vsub.f32 %v621, %v624
  %v627 = vadd.f32 %v626, 1e-05
  %v628 = vrsqrt.pop %v627
  %v629 = vmul.f32 %v628, %v627
  %v630 = vmul.f32 %v629, %v628
  %v631 = vmul.f32 0.5, %v630
  %v632 = vsub.f32 1.5, %v631
  %v633 = vmul.f32 %v628, %v632
  %vm634 = vweird.f32 %v627
  %vm635 = vweird.f32 %v628
  %vm636 = vmor %vm634, %vm635
  %v637 = vsel %vm636, %v628, %v633
  %639 = vst [vmem:[#allocation1] sm:$0xff] %v637
  %s640 = scalar_lea.vmem [#allocation1], 1
  %v641 = vld [vmem:[%s640] ss:$9 sm:$0xff]
  %v643 = vmul.f32 %v584, %v641
  %v644 = vmul.f32 %v621, %v643
  %v645 = vsub.f32 %v585, %v644
  %v647 = vperm.slane %v643, 0
  %v649 = vmul.f32 %v580, %v647
  %v650 = vmul.f32 %v581, %v647
  %v651 = vmul.f32 %v582, %v647
  %v652 = vmul.f32 %v583, %v647
  %v654 = vperm.slane %v645, 0
  %v656 = vadd.f32 %v649, %v654
  %v657 = vadd.f32 %v650, %v654
  %v658 = vadd.f32 %v651, %v654
  %v659 = vadd.f32 %v652, %v654
  %v660 = vld [vmem:[%s8] sm:$0xff]
  %v661 = vld [vmem:[%s8 + $0x8] sm:$0xff]
  %v662 = vld [vmem:[%s8 + $0x10] sm:$0xff]
  %v663 = vld [vmem:[%s8 + $0x18] sm:$0xff]
  %v664 = vadd.f32 %v656, %v660
  %v665 = vadd.f32 %v657, %v661
  %v666 = vadd.f32 %v658, %v662
  %v667 = vadd.f32 %v659, %v663
  %v668 = vmax.f32 %v664, 0.0
  %v669 = vmax.f32 %v665, 0.0
  %v670 = vmax.f32 %v666, 0.0
  %v671 = vmax.f32 %v667, 0.0
  %672 = vst [vmem:[%s8] sm:$0xff] %v668
  %673 = vst [vmem:[%s8 + $0x8] sm:$0xff] %v669
  %674 = vst [vmem:[%s8 + $0x10] sm:$0xff] %v670
  %675 = vst [vmem:[%s8 + $0x18] sm:$0xff] %v671
  // Predicated region
  $region34: #{basic_block_pallas.1} parent=0 // pred_check
    _
  $region35: #{basic_block_pallas.1} parent=0 // pred_check_branch
    %677 = sbr.rel (0) target = $region37
  $region36: #{basic_block_pallas.1} parent=0 // pred_region
    _
  $region37: #{basic_block_pallas.1} parent=0 // pred_fallthru
    _
  // Predicated region
  $region38: #{basic_block_pallas.1} parent=0 // pred_check
    _
  $region39: #{basic_block_pallas.1} parent=0 // pred_check_branch
    %679 = sbr.rel (0) target = $region41
  $region40: #{basic_block_pallas.1} parent=0 // pred_region
    _
  $region41: #{basic_block_pallas.1} parent=0 // pred_fallthru
    _

</llo_original>
